<compile_context>
chip_gen: v5e
topology: v5e:2x2
jax: 0.10.0
libtpu: 0.0.40
codegen_flags: <defaults>
</compile_context>

<pallas_src>
import functools
from typing import Any, NamedTuple, Tuple

import jax
import jax.numpy as jnp
from jax.experimental import pallas as pl
from jax.experimental.pallas import tpu as pltpu

_LANE = 128      # lane width: feature dims padded to a multiple of this
_SUBLANE = 8     # f32 sublane count: row-tile multiple


def _round_up(x, m):
    return ((x + m - 1) // m) * m


def _cdiv(a, b):
    return (a + b - 1) // b


def _vmem_budget_bytes():
    """Generation-aware usable-VMEM budget (~75% of physical capacity)."""
    cap = None
    try:
        info = pltpu.get_tpu_info()
        cap = getattr(info, "vmem_capacity_bytes", None)
    except Exception:
        cap = None
    if not cap:
        cap = 64 << 20  # conservative (v7x-sized) fallback
    return int(0.75 * cap)


def _default_use_bf16():
    """Default to bf16 MXU inputs on bf16-native MXU generations (v6e / v7x)."""
    try:
        kind = jax.devices()[0].device_kind.lower()
    except Exception:
        return False
    return ("v6" in kind) or ("v7" in kind)


# ---- single-buffered resident (constant-index) BlockSpecs -------------------
try:
    _BUFFERED_ONE = pl.Buffered(1)
except Exception:            # very old jax: fall back to default double-buffering
    _BUFFERED_ONE = None

_RESIDENT_SINGLE_BUFFER = [_BUFFERED_ONE is not None]


def _resident_spec(shape, single_buffer):
    if single_buffer and _BUFFERED_ONE is not None:
        try:
            return pl.BlockSpec(shape, lambda i: (0, 0), pipeline_mode=_BUFFERED_ONE)
        except TypeError:
            pass
    return pl.BlockSpec(shape, lambda i: (0, 0))


# ---- kernel ------------------------------------------------------------------
def _fc_group_kernel(*refs, num_layers, relu_last):
    """refs = (x_ref, w0, b0, ..., w_{L-1}, b_{L-1}, out_ref).

    Fused per row tile: matmul (MXU, f32 accumulate) + bias + ReLU per hidden
    layer; the network's final layer is a plain Linear (relu_last=False on the
    last group).
    """
    x_ref = refs[0]
    out_ref = refs[-1]
    prm = refs[1:-1]

    h = x_ref[...]
    for l in range(num_layers):
        w_ref = prm[2 * l]
        b_ref = prm[2 * l + 1]
        acc = jnp.dot(h, w_ref[...], preferred_element_type=jnp.float32)
        acc = acc + b_ref[...].astype(jnp.float32)
        is_net_final_linear = (l == num_layers - 1) and not relu_last
        if not is_net_final_linear:
            acc = jnp.maximum(acc, 0.0)          # nn.ReLU
        if l < num_layers - 1:
            h = acc.astype(w_ref.dtype)          # back to MXU compute dtype
        else:
            h = acc
    out_ref[...] = h.astype(out_ref.dtype)


# ---- parameter preparation (hoisted out of the per-call path) -----------------
class PreparedFC(NamedTuple):
    padded: Tuple[jax.Array, ...]   # (w0, b0, w1, b1, ...) lane-padded
    dims: Tuple[int, ...]           # original feature dims (len = num_layers + 1)
    pdims: Tuple[int, ...]          # lane-padded feature dims
    compute_dtype: Any


def fc_prepare(params, use_bf16=None):
    """Lane-pad and cast the FC weights ONCE (reuse across forward calls)."""
    if use_bf16 is None:
        use_bf16 = _default_use_bf16()
    compute_dtype = jnp.bfloat16 if use_bf16 else jnp.float32

    dims = [params[0][0].shape[0]] + [w.shape[1] for (w, _) in params]
    pdims = [_round_up(d, _LANE) for d in dims]

    padded = []
    for l, (w, b) in enumerate(params):
        pw = jnp.zeros((pdims[l], pdims[l + 1]), compute_dtype)
        pw = pw.at[: w.shape[0], : w.shape[1]].set(w.astype(compute_dtype))
        b2 = jnp.reshape(b, (1, -1)).astype(jnp.float32)
        pb = jnp.zeros((1, pdims[l + 1]), jnp.float32)
        pb = pb.at[:, : b2.shape[1]].set(b2)
        padded += [pw, pb]
    return PreparedFC(tuple(padded), tuple(dims), tuple(pdims), compute_dtype)


def _group_layers(layer_bytes, max_group_bytes):
    """Greedy split of layers into groups whose resident weights fit the budget."""
    groups, cur, cur_b = [], [], 0
    for l, nb in enumerate(layer_bytes):
        if cur and cur_b + nb > max_group_bytes:
            groups.append(cur)
            cur, cur_b = [], 0
        cur.append(l)
        cur_b += nb
    if cur:
        groups.append(cur)
    return groups


def _run_group(h, prep, g, *, tm, n_pad, relu_last, out_dtype, budget,
               layer_bytes, interpret):
    pdims = prep.pdims
    pd_in = pdims[g[0]]
    pd_out = pdims[g[-1] + 1]
    pd_max = max(pdims[l] for l in range(g[0], g[-1] + 2))
    cd_it = jnp.dtype(prep.compute_dtype).itemsize
    out_it = jnp.dtype(out_dtype).itemsize

    group_params = []
    for l in g:
        group_params += [prep.padded[2 * l], prep.padded[2 * l + 1]]
    wbytes = sum(layer_bytes[l] for l in g)

    flops = 2 * n_pad * sum(pdims[l] * pdims[l + 1] for l in g)
    bytes_accessed = n_pad * pd_in * cd_it + n_pad * pd_out * out_it + wbytes
    cost = pl.CostEstimate(flops=flops, transcendentals=0,
                           bytes_accessed=bytes_accessed)

    def call(single_buffer):
        wfactor = 1 if single_buffer else 2
        # weights (resident) + double-buffered x/out tiles + f32 h/acc intermediates
        est = (wfactor * wbytes
               + 2 * tm * pd_in * cd_it
               + 2 * tm * pd_out * out_it
               + 2 * tm * pd_max * 4)
        vmem_limit = int(min(budget, max(est + (4 << 20), 16 << 20)))

        in_specs = [pl.BlockSpec((tm, pd_in), lambda i: (i, 0))]
        for arr in group_params:
            in_specs.append(_resident_spec(arr.shape, single_buffer))
        out_specs = pl.BlockSpec((tm, pd_out), lambda i: (i, 0))

        return pl.pallas_call(
            functools.partial(_fc_group_kernel, num_layers=len(g),
                              relu_last=relu_last),
            out_shape=jax.ShapeDtypeStruct((n_pad, pd_out), out_dtype),
            grid_spec=pltpu.PrefetchScalarGridSpec(
                num_scalar_prefetch=0,
                grid=(n_pad // tm,),
                in_specs=in_specs,
                out_specs=out_specs,
            ),
            compiler_params=pltpu.CompilerParams(
                dimension_semantics=("parallel",),
                vmem_limit_bytes=vmem_limit,
            ),
            cost_estimate=cost,
            interpret=interpret,
        )(h, *group_params)

    if _RESIDENT_SINGLE_BUFFER[0]:
        try:
            return call(True)
        except Exception:
            # pipeline_mode=pl.Buffered(1) unsupported here -> default buffering.
            _RESIDENT_SINGLE_BUFFER[0] = False
    return call(False)


def fc_forward(x, prep: PreparedFC, *, block_rows=1024, interpret=False,
               _force_group_weight_bytes=None):
    """Run the FC MLP with fused Pallas kernel(s), tiled over batch rows.

    x:    (..., in_features)
    prep: PreparedFC from fc_prepare (padding/casting hoisted out of this call).
    """
    orig_shape = x.shape
    out_dtype = x.dtype
    x2d = x.reshape(-1, orig_shape[-1])
    n, d_in = x2d.shape
    assert d_in == prep.dims[0], "input feature dim mismatch"

    pdims = prep.pdims
    num_layers = len(prep.dims) - 1
    out_dim = prep.dims[-1]
    compute_dtype = prep.compute_dtype
    cd_it = jnp.dtype(compute_dtype).itemsize
    out_it = jnp.dtype(out_dtype).itemsize

    budget = _vmem_budget_bytes()

    # ---- split layers into groups whose (single-buffered) weights fit VMEM ----
    layer_bytes = [prep.padded[2 * l].size * cd_it + prep.padded[2 * l + 1].size * 4
                   for l in range(num_layers)]
    weight_budget = _force_group_weight_bytes or max(1, int(0.5 * budget))
    groups = _group_layers(layer_bytes, weight_budget)

    # ---- row-tile planning (one tm / n_pad shared by all groups) ----
    wfactor = 1 if _RESIDENT_SINGLE_BUFFER[0] else 2
    n8 = _round_up(max(n, 1), _SUBLANE)
    tm = min(_round_up(block_rows, _SUBLANE), n8)
    for g in groups:
        pd_in = pdims[g[0]]
        pd_out = pdims[g[-1] + 1]
        pd_max = max(pdims[l] for l in range(g[0], g[-1] + 2))
        g_wbytes = wfactor * sum(layer_bytes[l] for l in g)
        per_row = (2 * pd_in * cd_it + 2 * pd_out * max(cd_it, out_it)
                   + 2 * pd_max * 4)
        avail = budget - g_wbytes - (4 << 20)
        if avail > 0:
            cap = max(_SUBLANE, (avail // per_row) // _SUBLANE * _SUBLANE)
            tm = min(tm, cap)
    # >= 4 grid steps (2 pipelined steps per TensorCore on 2-TC chips) when the
    # batch is large enough to make splitting worthwhile.
    if n8 >= 4 * 128 and _cdiv(n8, tm) < 4:
        tm = max(_SUBLANE, _round_up(_cdiv(n8, 4), _SUBLANE))
    n_pad = _round_up(n8, tm)

    # ---- input staging: pad only when actually needed ----
    h = x2d.astype(compute_dtype)
    if n_pad != n or pdims[0] != d_in:
        h = jnp.pad(h, ((0, n_pad - n), (0, pdims[0] - d_in)))

    # ---- run each layer group as one fused pallas_call ----
    for gi, g in enumerate(groups):
        is_last_group = gi == len(groups) - 1
        h = _run_group(
            h, prep, g, tm=tm, n_pad=n_pad,
            relu_last=not is_last_group,
            out_dtype=(out_dtype if is_last_group else compute_dtype),
            budget=budget, layer_bytes=layer_bytes, interpret=interpret)

    if n_pad != n or pdims[-1] != out_dim:
        h = h[:n, :out_dim]
    return h.reshape(*orig_shape[:-1], out_dim)


def fc_apply(x, params, *, use_bf16=None, **kw):
    """One-shot convenience wrapper (prefer fc_prepare + fc_forward for reuse)."""
    return fc_forward(x, fc_prepare(params, use_bf16=use_bf16), **kw)


# ---- reference / init ----------------------------------------------------------
def init_fc_params(key, in_features, out_features, hidden_features):
    """Mirrors init_weights_normal: kaiming_normal_(fan_in, relu) -> std=sqrt(2/fan_in),
    biases zero.  Weights stored transposed as (dim_in, dim_out) so y = x @ W + b."""
    dims = [in_features] + list(hidden_features) + [out_features]
    params = []
    for d_in, d_out in zip(dims[:-1], dims[1:]):
        key, sub = jax.random.split(key)
        std = (2.0 / d_in) ** 0.5
        w = std * jax.random.normal(sub, (d_in, d_out), dtype=jnp.float32)
        b = jnp.zeros((1, d_out), dtype=jnp.float32)
        params.append((w, b))
    return params


def fc_reference(x, params):
    h = x
    for i, (w, b) in enumerate(params):
        h = h @ w + b
        if i < len(params) - 1:
            h = jnp.maximum(h, 0.0)
    return h


if __name__ == "__main__":
    key = jax.random.PRNGKey(0)
    in_features, out_features = 16, 8
    hidden_features = [32, 32]

    k_x, k_p, k_x2 = jax.random.split(key, 3)
    params = init_fc_params(k_p, in_features, out_features, hidden_features)

    x = jax.random.normal(k_x, (128, in_features), dtype=jnp.float32)
    ref = fc_reference(x, params)

    # 1) f32 path (bit-exact vs reference), weights prepared once and reused.
    prep_f32 = fc_prepare(params, use_bf16=False)
    out = jax.block_until_ready(fc_forward(x, prep_f32))
    assert out.shape == (128, out_features)
    assert jnp.allclose(out, ref, atol=1e-5, rtol=1e-5)

    # 2) ragged batch (not a multiple of 8/128) exercises the padding path.
    x2 = jax.random.normal(k_x2, (100, in_features), dtype=jnp.float32)
    out2 = jax.block_until_ready(fc_forward(x2, prep_f32))
    ref2 = fc_reference(x2, params)
    assert out2.shape == (100, out_features)
    assert jnp.allclose(out2, ref2, atol=1e-5, rtol=1e-5)

    # 3) bf16 MXU-input path (f32 accumulation) — loose tolerance by design.
    prep_bf16 = fc_prepare(params, use_bf16=True)
    out_bf16 = jax.block_until_ready(fc_forward(x, prep_bf16))
    assert out_bf16.shape == (128, out_features)
    assert bool(jnp.all(jnp.isfinite(out_bf16)))
    assert jnp.allclose(out_bf16, ref, atol=5e-1, rtol=5e-1)

    # 4) multi-call layer-group fallback (forced tiny weight budget -> one
    #    pallas_call per layer), still exact in f32.
    out_split = jax.block_until_ready(
        fc_forward(x, prep_f32, _force_group_weight_bytes=1))
    assert out_split.shape == (128, out_features)
    assert jnp.allclose(out_split, ref, atol=1e-5, rtol=1e-5)

    print("KERNEL_OK")
</pallas_src>

<mosaic_0001>
module attributes {stable_mosaic.version = 11 : i64} {
  func.func @_fc_group_kernel(%arg0: i32, %arg1: memref<128x128xf32, #tpu.memory_space<vmem>>, %arg2: memref<128x128xf32, #tpu.memory_space<vmem>>, %arg3: memref<1x128xf32, #tpu.memory_space<vmem>>, %arg4: memref<128x128xf32, #tpu.memory_space<vmem>>, %arg5: memref<1x128xf32, #tpu.memory_space<vmem>>, %arg6: memref<128x128xf32, #tpu.memory_space<vmem>>, %arg7: memref<1x128xf32, #tpu.memory_space<vmem>>, %arg8: memref<128x128xf32, #tpu.memory_space<vmem>>) attributes {dimension_semantics = [#tpu.dimension_semantics<parallel>], iteration_bounds = array<i64: 1>, scalar_prefetch = 0 : i64, scratch_operands = 0 : i64, tpu.core_type = #tpu.core_type<tc>, window_params = [{transform_indices = @transform_0, window_bounds = array<i64: 128, 128>}, {pipeline_mode = #tpu.pipeline_mode<synchronous>, transform_indices = @transform_1, window_bounds = array<i64: 128, 128>}, {pipeline_mode = #tpu.pipeline_mode<synchronous>, transform_indices = @transform_2, window_bounds = array<i64: 1, 128>}, {pipeline_mode = #tpu.pipeline_mode<synchronous>, transform_indices = @transform_3, window_bounds = array<i64: 128, 128>}, {pipeline_mode = #tpu.pipeline_mode<synchronous>, transform_indices = @transform_4, window_bounds = array<i64: 1, 128>}, {pipeline_mode = #tpu.pipeline_mode<synchronous>, transform_indices = @transform_5, window_bounds = array<i64: 128, 128>}, {pipeline_mode = #tpu.pipeline_mode<synchronous>, transform_indices = @transform_6, window_bounds = array<i64: 1, 128>}, {transform_indices = @transform_7, window_bounds = array<i64: 128, 128>}]} {
    %c0 = arith.constant 0 : index
    %c0_0 = arith.constant 0 : index
    %0 = vector.load %arg1[%c0, %c0_0] : memref<128x128xf32, #tpu.memory_space<vmem>>, vector<128x128xf32>
    %c0_1 = arith.constant 0 : index
    %c0_2 = arith.constant 0 : index
    %1 = vector.load %arg2[%c0_1, %c0_2] : memref<128x128xf32, #tpu.memory_space<vmem>>, vector<128x128xf32>
    %cst = arith.constant dense<0.000000e+00> : vector<128x128xf32>
    %2 = tpu.matmul %0, %1, %cst {dimension_numbers = #tpu.dot_dimension_numbers<[1], [0], [0], [1], [0, 0, 1, 1], [], []>} : vector<128x128xf32>, vector<128x128xf32>, vector<128x128xf32> -> vector<128x128xf32>
    %c0_3 = arith.constant 0 : index
    %c0_4 = arith.constant 0 : index
    %3 = vector.load %arg3[%c0_3, %c0_4] : memref<1x128xf32, #tpu.memory_space<vmem>>, vector<1x128xf32>
    %4 = vector.broadcast %3 : vector<1x128xf32> to vector<128x128xf32>
    %5 = arith.addf %2, %4 : vector<128x128xf32>
    %cst_5 = arith.constant 0.000000e+00 : f32
    %6 = vector.broadcast %cst_5 : f32 to vector<128x128xf32>
    %7 = arith.maximumf %5, %6 : vector<128x128xf32>
    %c0_6 = arith.constant 0 : index
    %c0_7 = arith.constant 0 : index
    %8 = vector.load %arg4[%c0_6, %c0_7] : memref<128x128xf32, #tpu.memory_space<vmem>>, vector<128x128xf32>
    %cst_8 = arith.constant dense<0.000000e+00> : vector<128x128xf32>
    %9 = tpu.matmul %7, %8, %cst_8 {dimension_numbers = #tpu.dot_dimension_numbers<[1], [0], [0], [1], [0, 0, 1, 1], [], []>} : vector<128x128xf32>, vector<128x128xf32>, vector<128x128xf32> -> vector<128x128xf32>
    %c0_9 = arith.constant 0 : index
    %c0_10 = arith.constant 0 : index
    %10 = vector.load %arg5[%c0_9, %c0_10] : memref<1x128xf32, #tpu.memory_space<vmem>>, vector<1x128xf32>
    %11 = vector.broadcast %10 : vector<1x128xf32> to vector<128x128xf32>
    %12 = arith.addf %9, %11 : vector<128x128xf32>
    %cst_11 = arith.constant 0.000000e+00 : f32
    %13 = vector.broadcast %cst_11 : f32 to vector<128x128xf32>
    %14 = arith.maximumf %12, %13 : vector<128x128xf32>
    %c0_12 = arith.constant 0 : index
    %c0_13 = arith.constant 0 : index
    %15 = vector.load %arg6[%c0_12, %c0_13] : memref<128x128xf32, #tpu.memory_space<vmem>>, vector<128x128xf32>
    %cst_14 = arith.constant dense<0.000000e+00> : vector<128x128xf32>
    %16 = tpu.matmul %14, %15, %cst_14 {dimension_numbers = #tpu.dot_dimension_numbers<[1], [0], [0], [1], [0, 0, 1, 1], [], []>} : vector<128x128xf32>, vector<128x128xf32>, vector<128x128xf32> -> vector<128x128xf32>
    %c0_15 = arith.constant 0 : index
    %c0_16 = arith.constant 0 : index
    %17 = vector.load %arg7[%c0_15, %c0_16] : memref<1x128xf32, #tpu.memory_space<vmem>>, vector<1x128xf32>
    %18 = vector.broadcast %17 : vector<1x128xf32> to vector<128x128xf32>
    %19 = arith.addf %16, %18 : vector<128x128xf32>
    %c0_17 = arith.constant 0 : index
    %c0_18 = arith.constant 0 : index
    %20 = vector.load %arg8[%c0_17, %c0_18] : memref<128x128xf32, #tpu.memory_space<vmem>>, vector<128x128xf32>
    tpu.vector_store %arg8[%c0_17, %c0_18], %19 {strides = array<i32>} : memref<128x128xf32, #tpu.memory_space<vmem>>, vector<128x128xf32>,
    return
  }
  func.func @transform_0(%arg0: i32) -> (i32, i32) {
    %c0_i32 = arith.constant 0 : i32
    %c0_i32_0 = arith.constant 0 : i32
    return %arg0, %c0_i32 : i32, i32
  }
  func.func @transform_1(%arg0: i32) -> (i32, i32) {
    %c0_i32 = arith.constant 0 : i32
    %c0_i32_0 = arith.constant 0 : i32
    %c0_i32_1 = arith.constant 0 : i32
    return %c0_i32, %c0_i32_0 : i32, i32
  }
  func.func @transform_2(%arg0: i32) -> (i32, i32) {
    %c0_i32 = arith.constant 0 : i32
    %c0_i32_0 = arith.constant 0 : i32
    %c0_i32_1 = arith.constant 0 : i32
    return %c0_i32, %c0_i32_0 : i32, i32
  }
  func.func @transform_3(%arg0: i32) -> (i32, i32) {
    %c0_i32 = arith.constant 0 : i32
    %c0_i32_0 = arith.constant 0 : i32
    %c0_i32_1 = arith.constant 0 : i32
    return %c0_i32, %c0_i32_0 : i32, i32
  }
  func.func @transform_4(%arg0: i32) -> (i32, i32) {
    %c0_i32 = arith.constant 0 : i32
    %c0_i32_0 = arith.constant 0 : i32
    %c0_i32_1 = arith.constant 0 : i32
    return %c0_i32, %c0_i32_0 : i32, i32
  }
  func.func @transform_5(%arg0: i32) -> (i32, i32) {
    %c0_i32 = arith.constant 0 : i32
    %c0_i32_0 = arith.constant 0 : i32
    %c0_i32_1 = arith.constant 0 : i32
    return %c0_i32, %c0_i32_0 : i32, i32
  }
  func.func @transform_6(%arg0: i32) -> (i32, i32) {
    %c0_i32 = arith.constant 0 : i32
    %c0_i32_0 = arith.constant 0 : i32
    %c0_i32_1 = arith.constant 0 : i32
    return %c0_i32, %c0_i32_0 : i32, i32
  }
  func.func @transform_7(%arg0: i32) -> (i32, i32) {
    %c0_i32 = arith.constant 0 : i32
    %c0_i32_0 = arith.constant 0 : i32
    return %arg0, %c0_i32 : i32, i32
  }
}

module attributes {stable_mosaic.version = 11 : i64} {
  func.func @_fc_group_kernel(%arg0: i32, %arg1: memref<128x128xf32, #tpu.memory_space<vmem>>, %arg2: memref<128x128xf32, #tpu.memory_space<vmem>>, %arg3: memref<1x128xf32, #tpu.memory_space<vmem>>, %arg4: memref<128x128xf32, #tpu.memory_space<vmem>>, %arg5: memref<1x128xf32, #tpu.memory_space<vmem>>, %arg6: memref<128x128xf32, #tpu.memory_space<vmem>>, %arg7: memref<1x128xf32, #tpu.memory_space<vmem>>, %arg8: memref<128x128xf32, #tpu.memory_space<vmem>>) attributes {dimension_semantics = [#tpu.dimension_semantics<parallel>], iteration_bounds = array<i64: 1>, scalar_prefetch = 0 : i64, scratch_operands = 0 : i64, tpu.core_type = #tpu.core_type<tc>, window_params = [{transform_indices = @transform_0, window_bounds = array<i64: 128, 128>}, {pipeline_mode = #tpu.pipeline_mode<synchronous>, transform_indices = @transform_1, window_bounds = array<i64: 128, 128>}, {pipeline_mode = #tpu.pipeline_mode<synchronous>, transform_indices = @transform_2, window_bounds = array<i64: 1, 128>}, {pipeline_mode = #tpu.pipeline_mode<synchronous>, transform_indices = @transform_3, window_bounds = array<i64: 128, 128>}, {pipeline_mode = #tpu.pipeline_mode<synchronous>, transform_indices = @transform_4, window_bounds = array<i64: 1, 128>}, {pipeline_mode = #tpu.pipeline_mode<synchronous>, transform_indices = @transform_5, window_bounds = array<i64: 128, 128>}, {pipeline_mode = #tpu.pipeline_mode<synchronous>, transform_indices = @transform_6, window_bounds = array<i64: 1, 128>}, {transform_indices = @transform_7, window_bounds = array<i64: 128, 128>}]} {
    %c0 = arith.constant 0 : index
    %c0_0 = arith.constant 0 : index
    %0 = vector.load %arg1[%c0, %c0_0] : memref<128x128xf32, #tpu.memory_space<vmem>>, vector<128x128xf32>
    %c0_1 = arith.constant 0 : index
    %c0_2 = arith.constant 0 : index
    %1 = vector.load %arg2[%c0_1, %c0_2] : memref<128x128xf32, #tpu.memory_space<vmem>>, vector<128x128xf32>
    %cst = arith.constant dense<0.000000e+00> : vector<128x128xf32>
    %2 = tpu.matmul %0, %1, %cst {dimension_numbers = #tpu.dot_dimension_numbers<[1], [0], [0], [1], [0, 0, 1, 1], [], []>} : vector<128x128xf32>, vector<128x128xf32>, vector<128x128xf32> -> vector<128x128xf32>
    %c0_3 = arith.constant 0 : index
    %c0_4 = arith.constant 0 : index
    %3 = vector.load %arg3[%c0_3, %c0_4] : memref<1x128xf32, #tpu.memory_space<vmem>>, vector<1x128xf32>
    %4 = vector.broadcast %3 : vector<1x128xf32> to vector<128x128xf32>
    %5 = arith.addf %2, %4 : vector<128x128xf32>
    %cst_5 = arith.constant 0.000000e+00 : f32
    %6 = vector.broadcast %cst_5 : f32 to vector<128x128xf32>
    %7 = arith.maximumf %5, %6 : vector<128x128xf32>
    %c0_6 = arith.constant 0 : index
    %c0_7 = arith.constant 0 : index
    %8 = vector.load %arg4[%c0_6, %c0_7] : memref<128x128xf32, #tpu.memory_space<vmem>>, vector<128x128xf32>
    %cst_8 = arith.constant dense<0.000000e+00> : vector<128x128xf32>
    %9 = tpu.matmul %7, %8, %cst_8 {dimension_numbers = #tpu.dot_dimension_numbers<[1], [0], [0], [1], [0, 0, 1, 1], [], []>} : vector<128x128xf32>, vector<128x128xf32>, vector<128x128xf32> -> vector<128x128xf32>
    %c0_9 = arith.constant 0 : index
    %c0_10 = arith.constant 0 : index
    %10 = vector.load %arg5[%c0_9, %c0_10] : memref<1x128xf32, #tpu.memory_space<vmem>>, vector<1x128xf32>
    %11 = vector.broadcast %10 : vector<1x128xf32> to vector<128x128xf32>
    %12 = arith.addf %9, %11 : vector<128x128xf32>
    %cst_11 = arith.constant 0.000000e+00 : f32
    %13 = vector.broadcast %cst_11 : f32 to vector<128x128xf32>
    %14 = arith.maximumf %12, %13 : vector<128x128xf32>
    %c0_12 = arith.constant 0 : index
    %c0_13 = arith.constant 0 : index
    %15 = vector.load %arg6[%c0_12, %c0_13] : memref<128x128xf32, #tpu.memory_space<vmem>>, vector<128x128xf32>
    %cst_14 = arith.constant dense<0.000000e+00> : vector<128x128xf32>
    %16 = tpu.matmul %14, %15, %cst_14 {dimension_numbers = #tpu.dot_dimension_numbers<[1], [0], [0], [1], [0, 0, 1, 1], [], []>} : vector<128x128xf32>, vector<128x128xf32>, vector<128x128xf32> -> vector<128x128xf32>
    %c0_15 = arith.constant 0 : index
    %c0_16 = arith.constant 0 : index
    %17 = vector.load %arg7[%c0_15, %c0_16] : memref<1x128xf32, #tpu.memory_space<vmem>>, vector<1x128xf32>
    %18 = vector.broadcast %17 : vector<1x128xf32> to vector<128x128xf32>
    %19 = arith.addf %16, %18 : vector<128x128xf32>
    %c0_17 = arith.constant 0 : index
    %c0_18 = arith.constant 0 : index
    %20 = vector.load %arg8[%c0_17, %c0_18] : memref<128x128xf32, #tpu.memory_space<vmem>>, vector<128x128xf32>
    tpu.vector_store %arg8[%c0_17, %c0_18], %19 {strides = array<i32>} : memref<128x128xf32, #tpu.memory_space<vmem>>, vector<128x128xf32>,
    return
  }
  func.func @transform_0(%arg0: i32) -> (i32, i32) {
    %c0_i32 = arith.constant 0 : i32
    %c0_i32_0 = arith.constant 0 : i32
    return %arg0, %c0_i32 : i32, i32
  }
  func.func @transform_1(%arg0: i32) -> (i32, i32) {
    %c0_i32 = arith.constant 0 : i32
    %c0_i32_0 = arith.constant 0 : i32
    %c0_i32_1 = arith.constant 0 : i32
    return %c0_i32, %c0_i32_0 : i32, i32
  }
  func.func @transform_2(%arg0: i32) -> (i32, i32) {
    %c0_i32 = arith.constant 0 : i32
    %c0_i32_0 = arith.constant 0 : i32
    %c0_i32_1 = arith.constant 0 : i32
    return %c0_i32, %c0_i32_0 : i32, i32
  }
  func.func @transform_3(%arg0: i32) -> (i32, i32) {
    %c0_i32 = arith.constant 0 : i32
    %c0_i32_0 = arith.constant 0 : i32
    %c0_i32_1 = arith.constant 0 : i32
    return %c0_i32, %c0_i32_0 : i32, i32
  }
  func.func @transform_4(%arg0: i32) -> (i32, i32) {
    %c0_i32 = arith.constant 0 : i32
    %c0_i32_0 = arith.constant 0 : i32
    %c0_i32_1 = arith.constant 0 : i32
    return %c0_i32, %c0_i32_0 : i32, i32
  }
  func.func @transform_5(%arg0: i32) -> (i32, i32) {
    %c0_i32 = arith.constant 0 : i32
    %c0_i32_0 = arith.constant 0 : i32
    %c0_i32_1 = arith.constant 0 : i32
    return %c0_i32, %c0_i32_0 : i32, i32
  }
  func.func @transform_6(%arg0: i32) -> (i32, i32) {
    %c0_i32 = arith.constant 0 : i32
    %c0_i32_0 = arith.constant 0 : i32
    %c0_i32_1 = arith.constant 0 : i32
    return %c0_i32, %c0_i32_0 : i32, i32
  }
  func.func @transform_7(%arg0: i32) -> (i32, i32) {
    %c0_i32 = arith.constant 0 : i32
    %c0_i32_0 = arith.constant 0 : i32
    return %arg0, %c0_i32 : i32, i32
  }
}

</mosaic_0001>

<llo_original>
// kernel: tpu_custom_call.1
$region0: #{tpu_custom_call.1}
  #allocation0 [shape = 'u32[]', space=smem, size = 0x4, offset = 0x4, fixed_abs, tag = 'smem constant byte address 0x4 - core index']
  #allocation1 [shape = 'u32[72,128]{1,0:T(1,128)}', space=vmem, size = 0x9000, scoped, tag = 'internal scratch']
  %s0 = inlined_call_operand.hbm [shape: f32[128,128], index: 0, kind: input, shape index: {}]
  %s1 = inlined_call_operand.hbm [shape: f32[128,128], index: 1, kind: input, shape index: {}]
  %s2 = inlined_call_operand.vmem [shape: f32[1,128], index: 2, kind: input, shape index: {}]
  %s3 = inlined_call_operand.hbm [shape: f32[128,128], index: 3, kind: input, shape index: {}]
  %s4 = inlined_call_operand.vmem [shape: f32[1,128], index: 4, kind: input, shape index: {}]
  %s5 = inlined_call_operand.hbm [shape: f32[128,128], index: 5, kind: input, shape index: {}]
  %s6 = inlined_call_operand.vmem [shape: f32[1,128], index: 6, kind: input, shape index: {}]
  %s7 = inlined_call_operand.hbm [shape: f32[128,128], index: 7, kind: output, shape index: {}]
  %s8 = sld [smem:[#allocation0]]
  $region54: #{tpu_custom_call.1} parent=0
    _
  %s10 = ssub.s32 1, %s8
  %s11 = scalar_select 0, %s10, %s8
  $region1: #{tpu_custom_call.1} parent=0
    #allocation2 [shape = 'u8[65536]{0}', space=vmem, size = 0x10000, scoped, tag = 'input window, operand 0, single buffered']
    #allocation3 [shape = 's32[1]{0}', space=sflag, size = 0x4, scoped, tag = 'scoped memory for tpu_custom_call.1']
    #allocation4 [shape = 's32[1]{0}', space=sflag, size = 0x4, scoped, tag = 'scoped memory for tpu_custom_call.1']
    #allocation5 [shape = 'u8[65536]{0}', space=vmem, size = 0x10000, scoped, tag = 'input window, operand 1, single buffered']
    #allocation6 [shape = 's32[1]{0}', space=sflag, size = 0x4, scoped, tag = 'scoped memory for tpu_custom_call.1']
    #allocation7 [shape = 'u8[65536]{0}', space=vmem, size = 0x10000, scoped, tag = 'input window, operand 3, single buffered']
    #allocation8 [shape = 'u8[65536]{0}', space=vmem, size = 0x10000, scoped, tag = 'input window, operand 5, single buffered']
    #allocation9 [shape = 's32[1]{0}', space=sflag, size = 0x4, scoped, tag = 'scoped memory for tpu_custom_call.1']
    #allocation10 [shape = 'u8[65536]{0}', space=vmem, size = 0x10000, scoped, tag = 'output window, operand 0, single buffered']
    %12 = vsyncpa [#allocation3], 0
    %13 = vsyncpa [#allocation6], 0
    %14 = vsyncpa [#allocation9], 0
    %15 = vsyncpa [#allocation4], 0
    // Predicated region
    $region2: #{tpu_custom_call.1} parent=1 // pred_check
      _
    $region3: #{tpu_custom_call.1} parent=1 // pred_check_branch
      %17 = sbr.rel (0) target = $region5
    $region4: #{tpu_custom_call.1} parent=1 // pred_region
      %19 = vsyncadd [#allocation3], 0
      %s20 = sshll.u32 %s0, 4
      %s21 = int_to_ptr.hbm [resolvable:$true] %s20
      %s22 = sshll.u32 [#allocation2], 4
      %s23 = int_to_ptr.vmem [resolvable:$true] %s22
      %28 = dma.hbm_to_vmem [thread:$0]  %s21, 2048, %s23, [#allocation3], 128, 128, 8
    $region5: #{tpu_custom_call.1} parent=1 // pred_fallthru
      _
    // Predicated region
    $region6: #{tpu_custom_call.1} parent=1 // pred_check
      _
    $region7: #{tpu_custom_call.1} parent=1 // pred_check_branch
      %30 = sbr.rel (0) target = $region9
    $region8: #{tpu_custom_call.1} parent=1 // pred_region
      %32 = vsyncadd [#allocation6], 0
      %s33 = sshll.u32 %s1, 4
      %s34 = int_to_ptr.hbm [resolvable:$true] %s33
      %s35 = sshll.u32 [#allocation5], 4
      %s36 = int_to_ptr.vmem [resolvable:$true] %s35
      %41 = dma.hbm_to_vmem [thread:$0]  %s34, 2048, %s36, [#allocation6], 128, 128, 8
    $region9: #{tpu_custom_call.1} parent=1 // pred_fallthru
      _
    // Predicated region
    $region10: #{tpu_custom_call.1} parent=1 // pred_check
      _
    $region11: #{tpu_custom_call.1} parent=1 // pred_check_branch
      %43 = sbr.rel (0) target = $region13
    $region12: #{tpu_custom_call.1} parent=1 // pred_region
      _
    $region13: #{tpu_custom_call.1} parent=1 // pred_fallthru
      _
    // Predicated region
    $region14: #{tpu_custom_call.1} parent=1 // pred_check
      _
    $region15: #{tpu_custom_call.1} parent=1 // pred_check_branch
      %45 = sbr.rel (0) target = $region17
    $region16: #{tpu_custom_call.1} parent=1 // pred_region
      %47 = vsyncadd [#allocation6], 0
      %s48 = sshll.u32 %s3, 4
      %s49 = int_to_ptr.hbm [resolvable:$true] %s48
      %s50 = sshll.u32 [#allocation7], 4
      %s51 = int_to_ptr.vmem [resolvable:$true] %s50
      %56 = dma.hbm_to_vmem [thread:$0]  %s49, 2048, %s51, [#allocation6], 128, 128, 8
    $region17: #{tpu_custom_call.1} parent=1 // pred_fallthru
      _
    // Predicated region
    $region18: #{tpu_custom_call.1} parent=1 // pred_check
      _
    $region19: #{tpu_custom_call.1} parent=1 // pred_check_branch
      %58 = sbr.rel (0) target = $region21
    $region20: #{tpu_custom_call.1} parent=1 // pred_region
      _
    $region21: #{tpu_custom_call.1} parent=1 // pred_fallthru
      _
    // Predicated region
    $region22: #{tpu_custom_call.1} parent=1 // pred_check
      _
    $region23: #{tpu_custom_call.1} parent=1 // pred_check_branch
      %60 = sbr.rel (0) target = $region25
    $region24: #{tpu_custom_call.1} parent=1 // pred_region
      %62 = vsyncadd [#allocation9], 0
      %s63 = sshll.u32 %s5, 4
      %s64 = int_to_ptr.hbm [resolvable:$true] %s63
      %s65 = sshll.u32 [#allocation8], 4
      %s66 = int_to_ptr.vmem [resolvable:$true] %s65
      %71 = dma.hbm_to_vmem [thread:$0]  %s64, 2048, %s66, [#allocation9], 128, 128, 8
    $region25: #{tpu_custom_call.1} parent=1 // pred_fallthru
      _
    // Predicated region
    $region26: #{tpu_custom_call.1} parent=1 // pred_check
      _
    $region27: #{tpu_custom_call.1} parent=1 // pred_check_branch
      %73 = sbr.rel (0) target = $region29
    $region28: #{tpu_custom_call.1} parent=1 // pred_region
      _
    $region29: #{tpu_custom_call.1} parent=1 // pred_fallthru
      _
    // Predicated region
    $region30: #{tpu_custom_call.1} parent=1 // pred_check
      _
    $region31: #{tpu_custom_call.1} parent=1 // pred_check_branch
      %75 = sbr.rel (0) target = $region33
    $region32: #{tpu_custom_call.1} parent=1 // pred_region
      %77 = dma.done [#allocation3], 2048
    $region33: #{tpu_custom_call.1} parent=1 // pred_fallthru
      _
    // Predicated region
    $region34: #{tpu_custom_call.1} parent=1 // pred_check
      _
    $region35: #{tpu_custom_call.1} parent=1 // pred_check_branch
      %79 = sbr.rel (0) target = $region37
    $region36: #{tpu_custom_call.1} parent=1 // pred_region
      %81 = dma.done [#allocation6], 2048
    $region37: #{tpu_custom_call.1} parent=1 // pred_fallthru
      _
    // Predicated region
    $region38: #{tpu_custom_call.1} parent=1 // pred_check
      _
    $region39: #{tpu_custom_call.1} parent=1 // pred_check_branch
      %83 = sbr.rel (0) target = $region41
    $region40: #{tpu_custom_call.1} parent=1 // pred_region
      %85 = dma.done [#allocation6], 2048
    $region41: #{tpu_custom_call.1} parent=1 // pred_fallthru
      _
    // Predicated region
    $region42: #{tpu_custom_call.1} parent=1 // pred_check
      _
    $region43: #{tpu_custom_call.1} parent=1 // pred_check_branch
      %87 = sbr.rel (0) target = $region45
    $region44: #{tpu_custom_call.1} parent=1 // pred_region
      %89 = dma.done [#allocation9], 2048
    $region45: #{tpu_custom_call.1} parent=1 // pred_fallthru
      _
    %v90 = vld [vmem:[#allocation2] sm:$0xff]
    %v91 = vld [vmem:[#allocation2 + $0x8] sm:$0xff]
    %v92 = vld [vmem:[#allocation2 + $0x10] sm:$0xff]
    %v93 = vld [vmem:[#allocation2 + $0x18] sm:$0xff]
    %v94 = vld [vmem:[#allocation2 + $0x20] sm:$0xff]
    %v95 = vld [vmem:[#allocation2 + $0x28] sm:$0xff]
    %v96 = vld [vmem:[#allocation2 + $0x30] sm:$0xff]
    %v97 = vld [vmem:[#allocation2 + $0x38] sm:$0xff]
    %v98 = vld [vmem:[#allocation2 + $0x40] sm:$0xff]
    %v99 = vld [vmem:[#allocation2 + $0x48] sm:$0xff]
    %v100 = vld [vmem:[#allocation2 + $0x50] sm:$0xff]
    %v101 = vld [vmem:[#allocation2 + $0x58] sm:$0xff]
    %v102 = vld [vmem:[#allocation2 + $0x60] sm:$0xff]
    %v103 = vld [vmem:[#allocation2 + $0x68] sm:$0xff]
    %v104 = vld [vmem:[#allocation2 + $0x70] sm:$0xff]
    %v105 = vld [vmem:[#allocation2 + $0x78] sm:$0xff]
    %v106 = vld [vmem:[#allocation5] sm:$0xff]
    %v107 = vld [vmem:[#allocation5 + $0x8] sm:$0xff]
    %v108 = vld [vmem:[#allocation5 + $0x10] sm:$0xff]
    %v109 = vld [vmem:[#allocation5 + $0x18] sm:$0xff]
    %v110 = vld [vmem:[#allocation5 + $0x20] sm:$0xff]
    %v111 = vld [vmem:[#allocation5 + $0x28] sm:$0xff]
    %v112 = vld [vmem:[#allocation5 + $0x30] sm:$0xff]
    %v113 = vld [vmem:[#allocation5 + $0x38] sm:$0xff]
    %v114 = vld [vmem:[#allocation5 + $0x40] sm:$0xff]
    %v115 = vld [vmem:[#allocation5 + $0x48] sm:$0xff]
    %v116 = vld [vmem:[#allocation5 + $0x50] sm:$0xff]
    %v117 = vld [vmem:[#allocation5 + $0x58] sm:$0xff]
    %v118 = vld [vmem:[#allocation5 + $0x60] sm:$0xff]
    %v119 = vld [vmem:[#allocation5 + $0x68] sm:$0xff]
    %v120 = vld [vmem:[#allocation5 + $0x70] sm:$0xff]
    %v121 = vld [vmem:[#allocation5 + $0x78] sm:$0xff]
    %v122 = vld [vmem:[%s2] sm:$0x1]
    %v124 = vperm.slane %v122, 0
    %126 = vmatpush.msra.mxu0 %v121
    %127 = vmatpush.msra.mxu0 %v120
    %128 = vmatpush.msra.mxu0 %v119
    %129 = vmatpush.msra.mxu0 %v118
    %130 = vmatpush.msra.mxu0 %v117
    %131 = vmatpush.msra.mxu0 %v116
    %132 = vmatpush.msra.mxu0 %v115
    %133 = vmatpush.msra.mxu0 %v114
    %134 = vmatpush.msra.mxu0 %v113
    %135 = vmatpush.msra.mxu0 %v112
    %136 = vmatpush.msra.mxu0 %v111
    %137 = vmatpush.msra.mxu0 %v110
    %138 = vmatpush.msra.mxu0 %v109
    %139 = vmatpush.msra.mxu0 %v108
    %140 = vmatpush.msra.mxu0 %v107
    %141 = vmatpush.msra.mxu0 %v106
    %142 = vmatmul.f32.gmra.mxu0 %v90
    %v143 = vpop.f32.mrf.mxu0
    %v144 = vadd.f32 %v124, %v143
    %145 = vmatmul.f32.gmra.mxu0 %v91
    %v146 = vpop.f32.mrf.mxu0
    %v147 = vadd.f32 %v124, %v146
    %148 = vmatmul.f32.gmra.mxu0 %v92
    %v149 = vpop.f32.mrf.mxu0
    %v150 = vadd.f32 %v124, %v149
    %151 = vmatmul.f32.gmra.mxu0 %v93
    %v152 = vpop.f32.mrf.mxu0
    %v153 = vadd.f32 %v124, %v152
    %154 = vmatmul.f32.gmra.mxu0 %v94
    %v155 = vpop.f32.mrf.mxu0
    %v156 = vadd.f32 %v124, %v155
    %157 = vmatmul.f32.gmra.mxu0 %v95
    %v158 = vpop.f32.mrf.mxu0
    %v159 = vadd.f32 %v124, %v158
    %160 = vmatmul.f32.gmra.mxu0 %v96
    %v161 = vpop.f32.mrf.mxu0
    %v162 = vadd.f32 %v124, %v161
    %163 = vmatmul.f32.gmra.mxu0 %v97
    %v164 = vpop.f32.mrf.mxu0
    %v165 = vadd.f32 %v124, %v164
    %166 = vmatmul.f32.gmra.mxu0 %v98
    %v167 = vpop.f32.mrf.mxu0
    %v168 = vadd.f32 %v124, %v167
    %169 = vmatmul.f32.gmra.mxu0 %v99
    %v170 = vpop.f32.mrf.mxu0
    %v171 = vadd.f32 %v124, %v170
    %172 = vmatmul.f32.gmra.mxu0 %v100
    %v173 = vpop.f32.mrf.mxu0
    %v174 = vadd.f32 %v124, %v173
    %175 = vmatmul.f32.gmra.mxu0 %v101
    %v176 = vpop.f32.mrf.mxu0
    %v177 = vadd.f32 %v124, %v176
    %178 = vmatmul.f32.gmra.mxu0 %v102
    %v179 = vpop.f32.mrf.mxu0
    %v180 = vadd.f32 %v124, %v179
    %181 = vmatmul.f32.gmra.mxu0 %v103
    %v182 = vpop.f32.mrf.mxu0
    %v183 = vadd.f32 %v124, %v182
    %184 = vmatmul.f32.gmra.mxu0 %v104
    %v185 = vpop.f32.mrf.mxu0
    %v186 = vadd.f32 %v124, %v185
    %187 = vmatmul.f32.gmra.mxu0 %v105
    %v188 = vpop.f32.mrf.mxu0
    %v189 = vadd.f32 %v124, %v188
    %190 = vdwg.mxu0
    %v191 = vmax.f32 %v144, 0.0
    %v192 = vmax.f32 %v147, 0.0
    %v193 = vmax.f32 %v150, 0.0
    %v194 = vmax.f32 %v153, 0.0
    %v195 = vmax.f32 %v156, 0.0
    %v196 = vmax.f32 %v159, 0.0
    %v197 = vmax.f32 %v162, 0.0
    %v198 = vmax.f32 %v165, 0.0
    %v199 = vmax.f32 %v168, 0.0
    %v200 = vmax.f32 %v171, 0.0
    %v201 = vmax.f32 %v174, 0.0
    %v202 = vmax.f32 %v177, 0.0
    %v203 = vmax.f32 %v180, 0.0
    %v204 = vmax.f32 %v183, 0.0
    %v205 = vmax.f32 %v186, 0.0
    %v206 = vmax.f32 %v189, 0.0
    %v207 = vld [vmem:[#allocation7] sm:$0xff]
    %v208 = vld [vmem:[#allocation7 + $0x8] sm:$0xff]
    %v209 = vld [vmem:[#allocation7 + $0x10] sm:$0xff]
    %v210 = vld [vmem:[#allocation7 + $0x18] sm:$0xff]
    %v211 = vld [vmem:[#allocation7 + $0x20] sm:$0xff]
    %v212 = vld [vmem:[#allocation7 + $0x28] sm:$0xff]
    %v213 = vld [vmem:[#allocation7 + $0x30] sm:$0xff]
    %v214 = vld [vmem:[#allocation7 + $0x38] sm:$0xff]
    %v215 = vld [vmem:[#allocation7 + $0x40] sm:$0xff]
    %v216 = vld [vmem:[#allocation7 + $0x48] sm:$0xff]
    %v217 = vld [vmem:[#allocation7 + $0x50] sm:$0xff]
    %v218 = vld [vmem:[#allocation7 + $0x58] sm:$0xff]
    %v219 = vld [vmem:[#allocation7 + $0x60] sm:$0xff]
    %v220 = vld [vmem:[#allocation7 + $0x68] sm:$0xff]
    %v221 = vld [vmem:[#allocation7 + $0x70] sm:$0xff]
    %v222 = vld [vmem:[#allocation7 + $0x78] sm:$0xff]
    %v223 = vld [vmem:[%s4] sm:$0x1]
    %v225 = vperm.slane %v223, 0
    %227 = vmatpush.msra.mxu0 %v222
    %228 = vmatpush.msra.mxu0 %v221
    %229 = vmatpush.msra.mxu0 %v220
    %230 = vmatpush.msra.mxu0 %v219
    %231 = vmatpush.msra.mxu0 %v218
    %232 = vmatpush.msra.mxu0 %v217
    %233 = vmatpush.msra.mxu0 %v216
    %234 = vmatpush.msra.mxu0 %v215
    %235 = vmatpush.msra.mxu0 %v214
    %236 = vmatpush.msra.mxu0 %v213
    %237 = vmatpush.msra.mxu0 %v212
    %238 = vmatpush.msra.mxu0 %v211
    %239 = vmatpush.msra.mxu0 %v210
    %240 = vmatpush.msra.mxu0 %v209
    %241 = vmatpush.msra.mxu0 %v208
    %242 = vmatpush.msra.mxu0 %v207
    %243 = vmatmul.f32.gmra.mxu0 %v191
    %v244 = vpop.f32.mrf.mxu0
    %v245 = vadd.f32 %v225, %v244
    %246 = vmatmul.f32.gmra.mxu0 %v192
    %v247 = vpop.f32.mrf.mxu0
    %v248 = vadd.f32 %v225, %v247
    %249 = vmatmul.f32.gmra.mxu0 %v193
    %v250 = vpop.f32.mrf.mxu0
    %v251 = vadd.f32 %v225, %v250
    %252 = vmatmul.f32.gmra.mxu0 %v194
    %v253 = vpop.f32.mrf.mxu0
    %v254 = vadd.f32 %v225, %v253
    %255 = vmatmul.f32.gmra.mxu0 %v195
    %v256 = vpop.f32.mrf.mxu0
    %v257 = vadd.f32 %v225, %v256
    %258 = vmatmul.f32.gmra.mxu0 %v196
    %v259 = vpop.f32.mrf.mxu0
    %v260 = vadd.f32 %v225, %v259
    %261 = vmatmul.f32.gmra.mxu0 %v197
    %v262 = vpop.f32.mrf.mxu0
    %v263 = vadd.f32 %v225, %v262
    %264 = vmatmul.f32.gmra.mxu0 %v198
    %v265 = vpop.f32.mrf.mxu0
    %v266 = vadd.f32 %v225, %v265
    %267 = vmatmul.f32.gmra.mxu0 %v199
    %v268 = vpop.f32.mrf.mxu0
    %v269 = vadd.f32 %v225, %v268
    %270 = vmatmul.f32.gmra.mxu0 %v200
    %v271 = vpop.f32.mrf.mxu0
    %v272 = vadd.f32 %v225, %v271
    %273 = vmatmul.f32.gmra.mxu0 %v201
    %v274 = vpop.f32.mrf.mxu0
    %v275 = vadd.f32 %v225, %v274
    %276 = vmatmul.f32.gmra.mxu0 %v202
    %v277 = vpop.f32.mrf.mxu0
    %v278 = vadd.f32 %v225, %v277
    %279 = vmatmul.f32.gmra.mxu0 %v203
    %v280 = vpop.f32.mrf.mxu0
    %v281 = vadd.f32 %v225, %v280
    %282 = vmatmul.f32.gmra.mxu0 %v204
    %v283 = vpop.f32.mrf.mxu0
    %v284 = vadd.f32 %v225, %v283
    %285 = vmatmul.f32.gmra.mxu0 %v205
    %v286 = vpop.f32.mrf.mxu0
    %v287 = vadd.f32 %v225, %v286
    %288 = vmatmul.f32.gmra.mxu0 %v206
    %v289 = vpop.f32.mrf.mxu0
    %v290 = vadd.f32 %v225, %v289
    %291 = vdwg.mxu0
    %v292 = vmax.f32 %v245, 0.0
    %v293 = vmax.f32 %v248, 0.0
    %v294 = vmax.f32 %v251, 0.0
    %v295 = vmax.f32 %v254, 0.0
    %v296 = vmax.f32 %v257, 0.0
    %v297 = vmax.f32 %v260, 0.0
    %v298 = vmax.f32 %v263, 0.0
    %v299 = vmax.f32 %v266, 0.0
    %v300 = vmax.f32 %v269, 0.0
    %v301 = vmax.f32 %v272, 0.0
    %v302 = vmax.f32 %v275, 0.0
    %v303 = vmax.f32 %v278, 0.0
    %v304 = vmax.f32 %v281, 0.0
    %v305 = vmax.f32 %v284, 0.0
    %v306 = vmax.f32 %v287, 0.0
    %v307 = vmax.f32 %v290, 0.0
    %v308 = vld [vmem:[#allocation8] sm:$0xff]
    %v309 = vld [vmem:[#allocation8 + $0x8] sm:$0xff]
    %v310 = vld [vmem:[#allocation8 + $0x10] sm:$0xff]
    %v311 = vld [vmem:[#allocation8 + $0x18] sm:$0xff]
    %v312 = vld [vmem:[#allocation8 + $0x20] sm:$0xff]
    %v313 = vld [vmem:[#allocation8 + $0x28] sm:$0xff]
    %v314 = vld [vmem:[#allocation8 + $0x30] sm:$0xff]
    %v315 = vld [vmem:[#allocation8 + $0x38] sm:$0xff]
    %v316 = vld [vmem:[#allocation8 + $0x40] sm:$0xff]
    %v317 = vld [vmem:[#allocation8 + $0x48] sm:$0xff]
    %v318 = vld [vmem:[#allocation8 + $0x50] sm:$0xff]
    %v319 = vld [vmem:[#allocation8 + $0x58] sm:$0xff]
    %v320 = vld [vmem:[#allocation8 + $0x60] sm:$0xff]
    %v321 = vld [vmem:[#allocation8 + $0x68] sm:$0xff]
    %v322 = vld [vmem:[#allocation8 + $0x70] sm:$0xff]
    %v323 = vld [vmem:[#allocation8 + $0x78] sm:$0xff]
    %v324 = vld [vmem:[%s6] sm:$0x1]
    %v326 = vperm.slane %v324, 0
    %328 = vmatpush.msra.mxu0 %v323
    %329 = vmatpush.msra.mxu0 %v322
    %330 = vmatpush.msra.mxu0 %v321
    %331 = vmatpush.msra.mxu0 %v320
    %332 = vmatpush.msra.mxu0 %v319
    %333 = vmatpush.msra.mxu0 %v318
    %334 = vmatpush.msra.mxu0 %v317
    %335 = vmatpush.msra.mxu0 %v316
    %336 = vmatpush.msra.mxu0 %v315
    %337 = vmatpush.msra.mxu0 %v314
    %338 = vmatpush.msra.mxu0 %v313
    %339 = vmatpush.msra.mxu0 %v312
    %340 = vmatpush.msra.mxu0 %v311
    %341 = vmatpush.msra.mxu0 %v310
    %342 = vmatpush.msra.mxu0 %v309
    %343 = vmatpush.msra.mxu0 %v308
    %344 = vmatmul.f32.gmra.mxu0 %v292
    %v345 = vpop.f32.mrf.mxu0
    %v346 = vadd.f32 %v326, %v345
    %347 = vmatmul.f32.gmra.mxu0 %v293
    %v348 = vpop.f32.mrf.mxu0
    %v349 = vadd.f32 %v326, %v348
    %350 = vmatmul.f32.gmra.mxu0 %v294
    %v351 = vpop.f32.mrf.mxu0
    %v352 = vadd.f32 %v326, %v351
    %353 = vmatmul.f32.gmra.mxu0 %v295
    %v354 = vpop.f32.mrf.mxu0
    %v355 = vadd.f32 %v326, %v354
    %356 = vmatmul.f32.gmra.mxu0 %v296
    %v357 = vpop.f32.mrf.mxu0
    %v358 = vadd.f32 %v326, %v357
    %359 = vmatmul.f32.gmra.mxu0 %v297
    %v360 = vpop.f32.mrf.mxu0
    %v361 = vadd.f32 %v326, %v360
    %362 = vmatmul.f32.gmra.mxu0 %v298
    %v363 = vpop.f32.mrf.mxu0
    %v364 = vadd.f32 %v326, %v363
    %365 = vmatmul.f32.gmra.mxu0 %v299
    %v366 = vpop.f32.mrf.mxu0
    %v367 = vadd.f32 %v326, %v366
    %368 = vmatmul.f32.gmra.mxu0 %v300
    %v369 = vpop.f32.mrf.mxu0
    %v370 = vadd.f32 %v326, %v369
    %371 = vmatmul.f32.gmra.mxu0 %v301
    %v372 = vpop.f32.mrf.mxu0
    %v373 = vadd.f32 %v326, %v372
    %374 = vmatmul.f32.gmra.mxu0 %v302
    %v375 = vpop.f32.mrf.mxu0
    %v376 = vadd.f32 %v326, %v375
    %377 = vmatmul.f32.gmra.mxu0 %v303
    %v378 = vpop.f32.mrf.mxu0
    %v379 = vadd.f32 %v326, %v378
    %380 = vmatmul.f32.gmra.mxu0 %v304
    %v381 = vpop.f32.mrf.mxu0
    %v382 = vadd.f32 %v326, %v381
    %383 = vmatmul.f32.gmra.mxu0 %v305
    %v384 = vpop.f32.mrf.mxu0
    %v385 = vadd.f32 %v326, %v384
    %386 = vmatmul.f32.gmra.mxu0 %v306
    %v387 = vpop.f32.mrf.mxu0
    %v388 = vadd.f32 %v326, %v387
    %389 = vmatmul.f32.gmra.mxu0 %v307
    %v390 = vpop.f32.mrf.mxu0
    %v391 = vadd.f32 %v326, %v390
    %392 = vdwg.mxu0
    %393 = vst [vmem:[#allocation10] sm:$0xff] %v346
    %394 = vst [vmem:[#allocation10 + $0x8] sm:$0xff] %v349
    %395 = vst [vmem:[#allocation10 + $0x10] sm:$0xff] %v352
    %396 = vst [vmem:[#allocation10 + $0x18] sm:$0xff] %v355
    %397 = vst [vmem:[#allocation10 + $0x20] sm:$0xff] %v358
    %398 = vst [vmem:[#allocation10 + $0x28] sm:$0xff] %v361
    %399 = vst [vmem:[#allocation10 + $0x30] sm:$0xff] %v364
    %400 = vst [vmem:[#allocation10 + $0x38] sm:$0xff] %v367
    %401 = vst [vmem:[#allocation10 + $0x40] sm:$0xff] %v370
    %402 = vst [vmem:[#allocation10 + $0x48] sm:$0xff] %v373
    %403 = vst [vmem:[#allocation10 + $0x50] sm:$0xff] %v376
    %404 = vst [vmem:[#allocation10 + $0x58] sm:$0xff] %v379
    %405 = vst [vmem:[#allocation10 + $0x60] sm:$0xff] %v382
    %406 = vst [vmem:[#allocation10 + $0x68] sm:$0xff] %v385
    %407 = vst [vmem:[#allocation10 + $0x70] sm:$0xff] %v388
    %408 = vst [vmem:[#allocation10 + $0x78] sm:$0xff] %v391
    // Predicated region
    $region46: #{tpu_custom_call.1} parent=1 // pred_check
      _
    $region47: #{tpu_custom_call.1} parent=1 // pred_check_branch
      %410 = sbr.rel (0) target = $region49
    $region48: #{tpu_custom_call.1} parent=1 // pred_region
      %412 = vsyncadd [#allocation4], 0
      %s413 = sshll.u32 [#allocation10], 4
      %s414 = int_to_ptr.vmem [resolvable:$true] %s413
      %s415 = sshll.u32 %s7, 4
      %s416 = int_to_ptr.hbm [resolvable:$true] %s415
      %421 = dma.vmem_to_hbm [thread:$0]  %s414, 2048, %s416, [#allocation4], 128, 128, 8
    $region49: #{tpu_custom_call.1} parent=1 // pred_fallthru
      _
    // Predicated region
    $region50: #{tpu_custom_call.1} parent=1 // pred_check
      _
    $region51: #{tpu_custom_call.1} parent=1 // pred_check_branch
      %423 = sbr.rel (0) target = $region53
    $region52: #{tpu_custom_call.1} parent=1 // pred_region
      %425 = dma.done [#allocation4], 2048
    $region53: #{tpu_custom_call.1} parent=1 // pred_fallthru
      _
    %426 = vsyncpa [#allocation3], 1
    %427 = vsyncpa [#allocation6], 1
    %428 = vsyncpa [#allocation9], 1
    %429 = vsyncpa [#allocation4], 1

// kernel: tpu_custom_call.1
$region0: #{tpu_custom_call.1}
  #allocation0 [shape = 'u32[]', space=smem, size = 0x4, offset = 0x4, fixed_abs, tag = 'smem constant byte address 0x4 - core index']
  #allocation1 [shape = 'u32[72,128]{1,0:T(1,128)}', space=vmem, size = 0x9000, scoped, tag = 'internal scratch']
  %s0 = inlined_call_operand.hbm [shape: f32[128,128], index: 0, kind: input, shape index: {}]
  %s1 = inlined_call_operand.hbm [shape: f32[128,128], index: 1, kind: input, shape index: {}]
  %s2 = inlined_call_operand.vmem [shape: f32[1,128], index: 2, kind: input, shape index: {}]
  %s3 = inlined_call_operand.hbm [shape: f32[128,128], index: 3, kind: input, shape index: {}]
  %s4 = inlined_call_operand.vmem [shape: f32[1,128], index: 4, kind: input, shape index: {}]
  %s5 = inlined_call_operand.hbm [shape: f32[128,128], index: 5, kind: input, shape index: {}]
  %s6 = inlined_call_operand.vmem [shape: f32[1,128], index: 6, kind: input, shape index: {}]
  %s7 = inlined_call_operand.hbm [shape: f32[128,128], index: 7, kind: output, shape index: {}]
  %s8 = sld [smem:[#allocation0]]
  $region54: #{tpu_custom_call.1} parent=0
    _
  %s10 = ssub.s32 1, %s8
  %s11 = scalar_select 0, %s10, %s8
  $region1: #{tpu_custom_call.1} parent=0
    #allocation2 [shape = 'u8[65536]{0}', space=vmem, size = 0x10000, scoped, tag = 'input window, operand 0, single buffered']
    #allocation3 [shape = 's32[1]{0}', space=sflag, size = 0x4, scoped, tag = 'scoped memory for tpu_custom_call.1']
    #allocation4 [shape = 's32[1]{0}', space=sflag, size = 0x4, scoped, tag = 'scoped memory for tpu_custom_call.1']
    #allocation5 [shape = 'u8[65536]{0}', space=vmem, size = 0x10000, scoped, tag = 'input window, operand 1, single buffered']
    #allocation6 [shape = 's32[1]{0}', space=sflag, size = 0x4, scoped, tag = 'scoped memory for tpu_custom_call.1']
    #allocation7 [shape = 'u8[65536]{0}', space=vmem, size = 0x10000, scoped, tag = 'input window, operand 3, single buffered']
    #allocation8 [shape = 'u8[65536]{0}', space=vmem, size = 0x10000, scoped, tag = 'input window, operand 5, single buffered']
    #allocation9 [shape = 's32[1]{0}', space=sflag, size = 0x4, scoped, tag = 'scoped memory for tpu_custom_call.1']
    #allocation10 [shape = 'u8[65536]{0}', space=vmem, size = 0x10000, scoped, tag = 'output window, operand 0, single buffered']
    %12 = vsyncpa [#allocation3], 0
    %13 = vsyncpa [#allocation6], 0
    %14 = vsyncpa [#allocation9], 0
    %15 = vsyncpa [#allocation4], 0
    // Predicated region
    $region2: #{tpu_custom_call.1} parent=1 // pred_check
      _
    $region3: #{tpu_custom_call.1} parent=1 // pred_check_branch
      %17 = sbr.rel (0) target = $region5
    $region4: #{tpu_custom_call.1} parent=1 // pred_region
      %19 = vsyncadd [#allocation3], 0
      %s20 = sshll.u32 %s0, 4
      %s21 = int_to_ptr.hbm [resolvable:$true] %s20
      %s22 = sshll.u32 [#allocation2], 4
      %s23 = int_to_ptr.vmem [resolvable:$true] %s22
      %28 = dma.hbm_to_vmem [thread:$0]  %s21, 2048, %s23, [#allocation3], 128, 128, 8
    $region5: #{tpu_custom_call.1} parent=1 // pred_fallthru
      _
    // Predicated region
    $region6: #{tpu_custom_call.1} parent=1 // pred_check
      _
    $region7: #{tpu_custom_call.1} parent=1 // pred_check_branch
      %30 = sbr.rel (0) target = $region9
    $region8: #{tpu_custom_call.1} parent=1 // pred_region
      %32 = vsyncadd [#allocation6], 0
      %s33 = sshll.u32 %s1, 4
      %s34 = int_to_ptr.hbm [resolvable:$true] %s33
      %s35 = sshll.u32 [#allocation5], 4
      %s36 = int_to_ptr.vmem [resolvable:$true] %s35
      %41 = dma.hbm_to_vmem [thread:$0]  %s34, 2048, %s36, [#allocation6], 128, 128, 8
    $region9: #{tpu_custom_call.1} parent=1 // pred_fallthru
      _
    // Predicated region
    $region10: #{tpu_custom_call.1} parent=1 // pred_check
      _
    $region11: #{tpu_custom_call.1} parent=1 // pred_check_branch
      %43 = sbr.rel (0) target = $region13
    $region12: #{tpu_custom_call.1} parent=1 // pred_region
      _
    $region13: #{tpu_custom_call.1} parent=1 // pred_fallthru
      _
    // Predicated region
    $region14: #{tpu_custom_call.1} parent=1 // pred_check
      _
    $region15: #{tpu_custom_call.1} parent=1 // pred_check_branch
      %45 = sbr.rel (0) target = $region17
    $region16: #{tpu_custom_call.1} parent=1 // pred_region
      %47 = vsyncadd [#allocation6], 0
      %s48 = sshll.u32 %s3, 4
      %s49 = int_to_ptr.hbm [resolvable:$true] %s48
      %s50 = sshll.u32 [#allocation7], 4
      %s51 = int_to_ptr.vmem [resolvable:$true] %s50
      %56 = dma.hbm_to_vmem [thread:$0]  %s49, 2048, %s51, [#allocation6], 128, 128, 8
    $region17: #{tpu_custom_call.1} parent=1 // pred_fallthru
      _
    // Predicated region
    $region18: #{tpu_custom_call.1} parent=1 // pred_check
      _
    $region19: #{tpu_custom_call.1} parent=1 // pred_check_branch
      %58 = sbr.rel (0) target = $region21
    $region20: #{tpu_custom_call.1} parent=1 // pred_region
      _
    $region21: #{tpu_custom_call.1} parent=1 // pred_fallthru
      _
    // Predicated region
    $region22: #{tpu_custom_call.1} parent=1 // pred_check
      _
    $region23: #{tpu_custom_call.1} parent=1 // pred_check_branch
      %60 = sbr.rel (0) target = $region25
    $region24: #{tpu_custom_call.1} parent=1 // pred_region
      %62 = vsyncadd [#allocation9], 0
      %s63 = sshll.u32 %s5, 4
      %s64 = int_to_ptr.hbm [resolvable:$true] %s63
      %s65 = sshll.u32 [#allocation8], 4
      %s66 = int_to_ptr.vmem [resolvable:$true] %s65
      %71 = dma.hbm_to_vmem [thread:$0]  %s64, 2048, %s66, [#allocation9], 128, 128, 8
    $region25: #{tpu_custom_call.1} parent=1 // pred_fallthru
      _
    // Predicated region
    $region26: #{tpu_custom_call.1} parent=1 // pred_check
      _
    $region27: #{tpu_custom_call.1} parent=1 // pred_check_branch
      %73 = sbr.rel (0) target = $region29
    $region28: #{tpu_custom_call.1} parent=1 // pred_region
      _
    $region29: #{tpu_custom_call.1} parent=1 // pred_fallthru
      _
    // Predicated region
    $region30: #{tpu_custom_call.1} parent=1 // pred_check
      _
    $region31: #{tpu_custom_call.1} parent=1 // pred_check_branch
      %75 = sbr.rel (0) target = $region33
    $region32: #{tpu_custom_call.1} parent=1 // pred_region
      %77 = dma.done [#allocation3], 2048
    $region33: #{tpu_custom_call.1} parent=1 // pred_fallthru
      _
    // Predicated region
    $region34: #{tpu_custom_call.1} parent=1 // pred_check
      _
    $region35: #{tpu_custom_call.1} parent=1 // pred_check_branch
      %79 = sbr.rel (0) target = $region37
    $region36: #{tpu_custom_call.1} parent=1 // pred_region
      %81 = dma.done [#allocation6], 2048
    $region37: #{tpu_custom_call.1} parent=1 // pred_fallthru
      _
    // Predicated region
    $region38: #{tpu_custom_call.1} parent=1 // pred_check
      _
    $region39: #{tpu_custom_call.1} parent=1 // pred_check_branch
      %83 = sbr.rel (0) target = $region41
    $region40: #{tpu_custom_call.1} parent=1 // pred_region
      %85 = dma.done [#allocation6], 2048
    $region41: #{tpu_custom_call.1} parent=1 // pred_fallthru
      _
    // Predicated region
    $region42: #{tpu_custom_call.1} parent=1 // pred_check
      _
    $region43: #{tpu_custom_call.1} parent=1 // pred_check_branch
      %87 = sbr.rel (0) target = $region45
    $region44: #{tpu_custom_call.1} parent=1 // pred_region
      %89 = dma.done [#allocation9], 2048
    $region45: #{tpu_custom_call.1} parent=1 // pred_fallthru
      _
    %v90 = vld [vmem:[#allocation2] sm:$0xff]
    %v91 = vld [vmem:[#allocation2 + $0x8] sm:$0xff]
    %v92 = vld [vmem:[#allocation2 + $0x10] sm:$0xff]
    %v93 = vld [vmem:[#allocation2 + $0x18] sm:$0xff]
    %v94 = vld [vmem:[#allocation2 + $0x20] sm:$0xff]
    %v95 = vld [vmem:[#allocation2 + $0x28] sm:$0xff]
    %v96 = vld [vmem:[#allocation2 + $0x30] sm:$0xff]
    %v97 = vld [vmem:[#allocation2 + $0x38] sm:$0xff]
    %v98 = vld [vmem:[#allocation2 + $0x40] sm:$0xff]
    %v99 = vld [vmem:[#allocation2 + $0x48] sm:$0xff]
    %v100 = vld [vmem:[#allocation2 + $0x50] sm:$0xff]
    %v101 = vld [vmem:[#allocation2 + $0x58] sm:$0xff]
    %v102 = vld [vmem:[#allocation2 + $0x60] sm:$0xff]
    %v103 = vld [vmem:[#allocation2 + $0x68] sm:$0xff]
    %v104 = vld [vmem:[#allocation2 + $0x70] sm:$0xff]
    %v105 = vld [vmem:[#allocation2 + $0x78] sm:$0xff]
    %v106 = vld [vmem:[#allocation5] sm:$0xff]
    %v107 = vld [vmem:[#allocation5 + $0x8] sm:$0xff]
    %v108 = vld [vmem:[#allocation5 + $0x10] sm:$0xff]
    %v109 = vld [vmem:[#allocation5 + $0x18] sm:$0xff]
    %v110 = vld [vmem:[#allocation5 + $0x20] sm:$0xff]
    %v111 = vld [vmem:[#allocation5 + $0x28] sm:$0xff]
    %v112 = vld [vmem:[#allocation5 + $0x30] sm:$0xff]
    %v113 = vld [vmem:[#allocation5 + $0x38] sm:$0xff]
    %v114 = vld [vmem:[#allocation5 + $0x40] sm:$0xff]
    %v115 = vld [vmem:[#allocation5 + $0x48] sm:$0xff]
    %v116 = vld [vmem:[#allocation5 + $0x50] sm:$0xff]
    %v117 = vld [vmem:[#allocation5 + $0x58] sm:$0xff]
    %v118 = vld [vmem:[#allocation5 + $0x60] sm:$0xff]
    %v119 = vld [vmem:[#allocation5 + $0x68] sm:$0xff]
    %v120 = vld [vmem:[#allocation5 + $0x70] sm:$0xff]
    %v121 = vld [vmem:[#allocation5 + $0x78] sm:$0xff]
    %v122 = vld [vmem:[%s2] sm:$0x1]
    %v124 = vperm.slane %v122, 0
    %126 = vmatpush.msra.mxu0 %v121
    %127 = vmatpush.msra.mxu0 %v120
    %128 = vmatpush.msra.mxu0 %v119
    %129 = vmatpush.msra.mxu0 %v118
    %130 = vmatpush.msra.mxu0 %v117
    %131 = vmatpush.msra.mxu0 %v116
    %132 = vmatpush.msra.mxu0 %v115
    %133 = vmatpush.msra.mxu0 %v114
    %134 = vmatpush.msra.mxu0 %v113
    %135 = vmatpush.msra.mxu0 %v112
    %136 = vmatpush.msra.mxu0 %v111
    %137 = vmatpush.msra.mxu0 %v110
    %138 = vmatpush.msra.mxu0 %v109
    %139 = vmatpush.msra.mxu0 %v108
    %140 = vmatpush.msra.mxu0 %v107
    %141 = vmatpush.msra.mxu0 %v106
    %142 = vmatmul.f32.gmra.mxu0 %v90
    %v143 = vpop.f32.mrf.mxu0
    %v144 = vadd.f32 %v124, %v143
    %145 = vmatmul.f32.gmra.mxu0 %v91
    %v146 = vpop.f32.mrf.mxu0
    %v147 = vadd.f32 %v124, %v146
    %148 = vmatmul.f32.gmra.mxu0 %v92
    %v149 = vpop.f32.mrf.mxu0
    %v150 = vadd.f32 %v124, %v149
    %151 = vmatmul.f32.gmra.mxu0 %v93
    %v152 = vpop.f32.mrf.mxu0
    %v153 = vadd.f32 %v124, %v152
    %154 = vmatmul.f32.gmra.mxu0 %v94
    %v155 = vpop.f32.mrf.mxu0
    %v156 = vadd.f32 %v124, %v155
    %157 = vmatmul.f32.gmra.mxu0 %v95
    %v158 = vpop.f32.mrf.mxu0
    %v159 = vadd.f32 %v124, %v158
    %160 = vmatmul.f32.gmra.mxu0 %v96
    %v161 = vpop.f32.mrf.mxu0
    %v162 = vadd.f32 %v124, %v161
    %163 = vmatmul.f32.gmra.mxu0 %v97
    %v164 = vpop.f32.mrf.mxu0
    %v165 = vadd.f32 %v124, %v164
    %166 = vmatmul.f32.gmra.mxu0 %v98
    %v167 = vpop.f32.mrf.mxu0
    %v168 = vadd.f32 %v124, %v167
    %169 = vmatmul.f32.gmra.mxu0 %v99
    %v170 = vpop.f32.mrf.mxu0
    %v171 = vadd.f32 %v124, %v170
    %172 = vmatmul.f32.gmra.mxu0 %v100
    %v173 = vpop.f32.mrf.mxu0
    %v174 = vadd.f32 %v124, %v173
    %175 = vmatmul.f32.gmra.mxu0 %v101
    %v176 = vpop.f32.mrf.mxu0
    %v177 = vadd.f32 %v124, %v176
    %178 = vmatmul.f32.gmra.mxu0 %v102
    %v179 = vpop.f32.mrf.mxu0
    %v180 = vadd.f32 %v124, %v179
    %181 = vmatmul.f32.gmra.mxu0 %v103
    %v182 = vpop.f32.mrf.mxu0
    %v183 = vadd.f32 %v124, %v182
    %184 = vmatmul.f32.gmra.mxu0 %v104
    %v185 = vpop.f32.mrf.mxu0
    %v186 = vadd.f32 %v124, %v185
    %187 = vmatmul.f32.gmra.mxu0 %v105
    %v188 = vpop.f32.mrf.mxu0
    %v189 = vadd.f32 %v124, %v188
    %190 = vdwg.mxu0
    %v191 = vmax.f32 %v144, 0.0
    %v192 = vmax.f32 %v147, 0.0
    %v193 = vmax.f32 %v150, 0.0
    %v194 = vmax.f32 %v153, 0.0
    %v195 = vmax.f32 %v156, 0.0
    %v196 = vmax.f32 %v159, 0.0
    %v197 = vmax.f32 %v162, 0.0
    %v198 = vmax.f32 %v165, 0.0
    %v199 = vmax.f32 %v168, 0.0
    %v200 = vmax.f32 %v171, 0.0
    %v201 = vmax.f32 %v174, 0.0
    %v202 = vmax.f32 %v177, 0.0
    %v203 = vmax.f32 %v180, 0.0
    %v204 = vmax.f32 %v183, 0.0
    %v205 = vmax.f32 %v186, 0.0
    %v206 = vmax.f32 %v189, 0.0
    %v207 = vld [vmem:[#allocation7] sm:$0xff]
    %v208 = vld [vmem:[#allocation7 + $0x8] sm:$0xff]
    %v209 = vld [vmem:[#allocation7 + $0x10] sm:$0xff]
    %v210 = vld [vmem:[#allocation7 + $0x18] sm:$0xff]
    %v211 = vld [vmem:[#allocation7 + $0x20] sm:$0xff]
    %v212 = vld [vmem:[#allocation7 + $0x28] sm:$0xff]
    %v213 = vld [vmem:[#allocation7 + $0x30] sm:$0xff]
    %v214 = vld [vmem:[#allocation7 + $0x38] sm:$0xff]
    %v215 = vld [vmem:[#allocation7 + $0x40] sm:$0xff]
    %v216 = vld [vmem:[#allocation7 + $0x48] sm:$0xff]
    %v217 = vld [vmem:[#allocation7 + $0x50] sm:$0xff]
    %v218 = vld [vmem:[#allocation7 + $0x58] sm:$0xff]
    %v219 = vld [vmem:[#allocation7 + $0x60] sm:$0xff]
    %v220 = vld [vmem:[#allocation7 + $0x68] sm:$0xff]
    %v221 = vld [vmem:[#allocation7 + $0x70] sm:$0xff]
    %v222 = vld [vmem:[#allocation7 + $0x78] sm:$0xff]
    %v223 = vld [vmem:[%s4] sm:$0x1]
    %v225 = vperm.slane %v223, 0
    %227 = vmatpush.msra.mxu0 %v222
    %228 = vmatpush.msra.mxu0 %v221
    %229 = vmatpush.msra.mxu0 %v220
    %230 = vmatpush.msra.mxu0 %v219
    %231 = vmatpush.msra.mxu0 %v218
    %232 = vmatpush.msra.mxu0 %v217
    %233 = vmatpush.msra.mxu0 %v216
    %234 = vmatpush.msra.mxu0 %v215
    %235 = vmatpush.msra.mxu0 %v214
    %236 = vmatpush.msra.mxu0 %v213
    %237 = vmatpush.msra.mxu0 %v212
    %238 = vmatpush.msra.mxu0 %v211
    %239 = vmatpush.msra.mxu0 %v210
    %240 = vmatpush.msra.mxu0 %v209
    %241 = vmatpush.msra.mxu0 %v208
    %242 = vmatpush.msra.mxu0 %v207
    %243 = vmatmul.f32.gmra.mxu0 %v191
    %v244 = vpop.f32.mrf.mxu0
    %v245 = vadd.f32 %v225, %v244
    %246 = vmatmul.f32.gmra.mxu0 %v192
    %v247 = vpop.f32.mrf.mxu0
    %v248 = vadd.f32 %v225, %v247
    %249 = vmatmul.f32.gmra.mxu0 %v193
    %v250 = vpop.f32.mrf.mxu0
    %v251 = vadd.f32 %v225, %v250
    %252 = vmatmul.f32.gmra.mxu0 %v194
    %v253 = vpop.f32.mrf.mxu0
    %v254 = vadd.f32 %v225, %v253
    %255 = vmatmul.f32.gmra.mxu0 %v195
    %v256 = vpop.f32.mrf.mxu0
    %v257 = vadd.f32 %v225, %v256
    %258 = vmatmul.f32.gmra.mxu0 %v196
    %v259 = vpop.f32.mrf.mxu0
    %v260 = vadd.f32 %v225, %v259
    %261 = vmatmul.f32.gmra.mxu0 %v197
    %v262 = vpop.f32.mrf.mxu0
    %v263 = vadd.f32 %v225, %v262
    %264 = vmatmul.f32.gmra.mxu0 %v198
    %v265 = vpop.f32.mrf.mxu0
    %v266 = vadd.f32 %v225, %v265
    %267 = vmatmul.f32.gmra.mxu0 %v199
    %v268 = vpop.f32.mrf.mxu0
    %v269 = vadd.f32 %v225, %v268
    %270 = vmatmul.f32.gmra.mxu0 %v200
    %v271 = vpop.f32.mrf.mxu0
    %v272 = vadd.f32 %v225, %v271
    %273 = vmatmul.f32.gmra.mxu0 %v201
    %v274 = vpop.f32.mrf.mxu0
    %v275 = vadd.f32 %v225, %v274
    %276 = vmatmul.f32.gmra.mxu0 %v202
    %v277 = vpop.f32.mrf.mxu0
    %v278 = vadd.f32 %v225, %v277
    %279 = vmatmul.f32.gmra.mxu0 %v203
    %v280 = vpop.f32.mrf.mxu0
    %v281 = vadd.f32 %v225, %v280
    %282 = vmatmul.f32.gmra.mxu0 %v204
    %v283 = vpop.f32.mrf.mxu0
    %v284 = vadd.f32 %v225, %v283
    %285 = vmatmul.f32.gmra.mxu0 %v205
    %v286 = vpop.f32.mrf.mxu0
    %v287 = vadd.f32 %v225, %v286
    %288 = vmatmul.f32.gmra.mxu0 %v206
    %v289 = vpop.f32.mrf.mxu0
    %v290 = vadd.f32 %v225, %v289
    %291 = vdwg.mxu0
    %v292 = vmax.f32 %v245, 0.0
    %v293 = vmax.f32 %v248, 0.0
    %v294 = vmax.f32 %v251, 0.0
    %v295 = vmax.f32 %v254, 0.0
    %v296 = vmax.f32 %v257, 0.0
    %v297 = vmax.f32 %v260, 0.0
    %v298 = vmax.f32 %v263, 0.0
    %v299 = vmax.f32 %v266, 0.0
    %v300 = vmax.f32 %v269, 0.0
    %v301 = vmax.f32 %v272, 0.0
    %v302 = vmax.f32 %v275, 0.0
    %v303 = vmax.f32 %v278, 0.0
    %v304 = vmax.f32 %v281, 0.0
    %v305 = vmax.f32 %v284, 0.0
    %v306 = vmax.f32 %v287, 0.0
    %v307 = vmax.f32 %v290, 0.0
    %v308 = vld [vmem:[#allocation8] sm:$0xff]
    %v309 = vld [vmem:[#allocation8 + $0x8] sm:$0xff]
    %v310 = vld [vmem:[#allocation8 + $0x10] sm:$0xff]
    %v311 = vld [vmem:[#allocation8 + $0x18] sm:$0xff]
    %v312 = vld [vmem:[#allocation8 + $0x20] sm:$0xff]
    %v313 = vld [vmem:[#allocation8 + $0x28] sm:$0xff]
    %v314 = vld [vmem:[#allocation8 + $0x30] sm:$0xff]
    %v315 = vld [vmem:[#allocation8 + $0x38] sm:$0xff]
    %v316 = vld [vmem:[#allocation8 + $0x40] sm:$0xff]
    %v317 = vld [vmem:[#allocation8 + $0x48] sm:$0xff]
    %v318 = vld [vmem:[#allocation8 + $0x50] sm:$0xff]
    %v319 = vld [vmem:[#allocation8 + $0x58] sm:$0xff]
    %v320 = vld [vmem:[#allocation8 + $0x60] sm:$0xff]
    %v321 = vld [vmem:[#allocation8 + $0x68] sm:$0xff]
    %v322 = vld [vmem:[#allocation8 + $0x70] sm:$0xff]
    %v323 = vld [vmem:[#allocation8 + $0x78] sm:$0xff]
    %v324 = vld [vmem:[%s6] sm:$0x1]
    %v326 = vperm.slane %v324, 0
    %328 = vmatpush.msra.mxu0 %v323
    %329 = vmatpush.msra.mxu0 %v322
    %330 = vmatpush.msra.mxu0 %v321
    %331 = vmatpush.msra.mxu0 %v320
    %332 = vmatpush.msra.mxu0 %v319
    %333 = vmatpush.msra.mxu0 %v318
    %334 = vmatpush.msra.mxu0 %v317
    %335 = vmatpush.msra.mxu0 %v316
    %336 = vmatpush.msra.mxu0 %v315
    %337 = vmatpush.msra.mxu0 %v314
    %338 = vmatpush.msra.mxu0 %v313
    %339 = vmatpush.msra.mxu0 %v312
    %340 = vmatpush.msra.mxu0 %v311
    %341 = vmatpush.msra.mxu0 %v310
    %342 = vmatpush.msra.mxu0 %v309
    %343 = vmatpush.msra.mxu0 %v308
    %344 = vmatmul.f32.gmra.mxu0 %v292
    %v345 = vpop.f32.mrf.mxu0
    %v346 = vadd.f32 %v326, %v345
    %347 = vmatmul.f32.gmra.mxu0 %v293
    %v348 = vpop.f32.mrf.mxu0
    %v349 = vadd.f32 %v326, %v348
    %350 = vmatmul.f32.gmra.mxu0 %v294
    %v351 = vpop.f32.mrf.mxu0
    %v352 = vadd.f32 %v326, %v351
    %353 = vmatmul.f32.gmra.mxu0 %v295
    %v354 = vpop.f32.mrf.mxu0
    %v355 = vadd.f32 %v326, %v354
    %356 = vmatmul.f32.gmra.mxu0 %v296
    %v357 = vpop.f32.mrf.mxu0
    %v358 = vadd.f32 %v326, %v357
    %359 = vmatmul.f32.gmra.mxu0 %v297
    %v360 = vpop.f32.mrf.mxu0
    %v361 = vadd.f32 %v326, %v360
    %362 = vmatmul.f32.gmra.mxu0 %v298
    %v363 = vpop.f32.mrf.mxu0
    %v364 = vadd.f32 %v326, %v363
    %365 = vmatmul.f32.gmra.mxu0 %v299
    %v366 = vpop.f32.mrf.mxu0
    %v367 = vadd.f32 %v326, %v366
    %368 = vmatmul.f32.gmra.mxu0 %v300
    %v369 = vpop.f32.mrf.mxu0
    %v370 = vadd.f32 %v326, %v369
    %371 = vmatmul.f32.gmra.mxu0 %v301
    %v372 = vpop.f32.mrf.mxu0
    %v373 = vadd.f32 %v326, %v372
    %374 = vmatmul.f32.gmra.mxu0 %v302
    %v375 = vpop.f32.mrf.mxu0
    %v376 = vadd.f32 %v326, %v375
    %377 = vmatmul.f32.gmra.mxu0 %v303
    %v378 = vpop.f32.mrf.mxu0
    %v379 = vadd.f32 %v326, %v378
    %380 = vmatmul.f32.gmra.mxu0 %v304
    %v381 = vpop.f32.mrf.mxu0
    %v382 = vadd.f32 %v326, %v381
    %383 = vmatmul.f32.gmra.mxu0 %v305
    %v384 = vpop.f32.mrf.mxu0
    %v385 = vadd.f32 %v326, %v384
    %386 = vmatmul.f32.gmra.mxu0 %v306
    %v387 = vpop.f32.mrf.mxu0
    %v388 = vadd.f32 %v326, %v387
    %389 = vmatmul.f32.gmra.mxu0 %v307
    %v390 = vpop.f32.mrf.mxu0
    %v391 = vadd.f32 %v326, %v390
    %392 = vdwg.mxu0
    %393 = vst [vmem:[#allocation10] sm:$0xff] %v346
    %394 = vst [vmem:[#allocation10 + $0x8] sm:$0xff] %v349
    %395 = vst [vmem:[#allocation10 + $0x10] sm:$0xff] %v352
    %396 = vst [vmem:[#allocation10 + $0x18] sm:$0xff] %v355
    %397 = vst [vmem:[#allocation10 + $0x20] sm:$0xff] %v358
    %398 = vst [vmem:[#allocation10 + $0x28] sm:$0xff] %v361
    %399 = vst [vmem:[#allocation10 + $0x30] sm:$0xff] %v364
    %400 = vst [vmem:[#allocation10 + $0x38] sm:$0xff] %v367
    %401 = vst [vmem:[#allocation10 + $0x40] sm:$0xff] %v370
    %402 = vst [vmem:[#allocation10 + $0x48] sm:$0xff] %v373
    %403 = vst [vmem:[#allocation10 + $0x50] sm:$0xff] %v376
    %404 = vst [vmem:[#allocation10 + $0x58] sm:$0xff] %v379
    %405 = vst [vmem:[#allocation10 + $0x60] sm:$0xff] %v382
    %406 = vst [vmem:[#allocation10 + $0x68] sm:$0xff] %v385
    %407 = vst [vmem:[#allocation10 + $0x70] sm:$0xff] %v388
    %408 = vst [vmem:[#allocation10 + $0x78] sm:$0xff] %v391
    // Predicated region
    $region46: #{tpu_custom_call.1} parent=1 // pred_check
      _
    $region47: #{tpu_custom_call.1} parent=1 // pred_check_branch
      %410 = sbr.rel (0) target = $region49
    $region48: #{tpu_custom_call.1} parent=1 // pred_region
      %412 = vsyncadd [#allocation4], 0
      %s413 = sshll.u32 [#allocation10], 4
      %s414 = int_to_ptr.vmem [resolvable:$true] %s413
      %s415 = sshll.u32 %s7, 4
      %s416 = int_to_ptr.hbm [resolvable:$true] %s415
      %421 = dma.vmem_to_hbm [thread:$0]  %s414, 2048, %s416, [#allocation4], 128, 128, 8
    $region49: #{tpu_custom_call.1} parent=1 // pred_fallthru
      _
    // Predicated region
    $region50: #{tpu_custom_call.1} parent=1 // pred_check
      _
    $region51: #{tpu_custom_call.1} parent=1 // pred_check_branch
      %423 = sbr.rel (0) target = $region53
    $region52: #{tpu_custom_call.1} parent=1 // pred_region
      %425 = dma.done [#allocation4], 2048
    $region53: #{tpu_custom_call.1} parent=1 // pred_fallthru
      _
    %426 = vsyncpa [#allocation3], 1
    %427 = vsyncpa [#allocation6], 1
    %428 = vsyncpa [#allocation9], 1
    %429 = vsyncpa [#allocation4], 1

</llo_original>
